<compile_context>
chip_gen: v7x
topology: tpu7x:2x2x1
jax: 0.10.0
libtpu: 0.0.40
codegen_flags: <defaults>
</compile_context>

<pallas_src>
import functools

import jax
import jax.numpy as jnp
from jax.experimental import pallas as pl
from jax.experimental.pallas import tpu as pltpu


def _cdiv(a, b):
    return -(-a // b)


def _round_up(a, m):
    return _cdiv(a, m) * m


# Which code path executed last (introspection only; never printed).
LAST_KERNEL_PATH = [None]


# ---------------------------------------------------------------------------
# Kernels
# ---------------------------------------------------------------------------
def _tdnn_kernel_halo(xm_ref, xh_ref, w_ref, b_ref, o_ref, *, offsets, tT):
    """One (batch, time-tile) grid step; taps need a right halo.

    xm_ref: (1, C_in, tT)       main input chunk (time on lanes)
    xh_ref: (1, C_in, halo)     right-halo chunk (next frames, same array)
    w_ref:  (Ka, C_out, C_in)   active-tap filters
    b_ref:  (C_out, 1)          f32 bias column
    o_ref:  (1, C_out, tT)      lane-dense output tile
    """
    xm = xm_ref[0]                                        # (C_in, tT)
    # Lane-axis concat so shifted per-tap views exist; this is the only
    # remaining in-kernel copy (1/Ka of the removed sublane-concat traffic).
    # TODO(synk): split each tap into a main-dot + halo-dot to remove it too.
    xw = jnp.concatenate([xm, xh_ref[0]], axis=1)         # (C_in, tT + halo)

    acc = None
    for a, d in enumerate(offsets):                       # static Python loop
        xs = xm if d == 0 else xw[:, d:d + tT]            # static lane slice
        p = jnp.dot(w_ref[a], xs, preferred_element_type=jnp.float32)
        acc = p if acc is None else acc + p
    o_ref[0] = (acc + b_ref[...]).astype(o_ref.dtype)


def _tdnn_kernel_nohalo(xm_ref, w_ref, b_ref, o_ref):
    """Single active tap at offset 0 (e.g. context == [0]): plain affine."""
    acc = jnp.dot(w_ref[0], xm_ref[0], preferred_element_type=jnp.float32)
    o_ref[0] = (acc + b_ref[...]).astype(o_ref.dtype)


# ---------------------------------------------------------------------------
# Sizing helpers
# ---------------------------------------------------------------------------
def _device_kind():
    try:
        return jax.devices()[0].device_kind.lower()
    except Exception:
        return ""


def _vmem_budget_bytes():
    kind = _device_kind()
    if "v7" in kind:
        return 48 << 20   # 64 MiB physical VMEM per core on v7x; keep headroom
    return 96 << 20       # 128 MiB physical on v5e / v6e


def _default_time_tile():
    # v6e/v5e: larger tiles amortize per-step overhead and halo over-fetch;
    # v7x: keep tiles modest (per-core VMEM is half of v6e's).
    return 512 if "v7" in _device_kind() else 1024


def _fused_vmem_footprint(c_in_p, c_out_p, ka, tT, halo, need_halo,
                          out_itemsize, single_buffer_w):
    cb = 2                                                # bf16 compute dtype
    n_w = 1 if single_buffer_w else 2
    fp = 2 * c_in_p * tT * cb                             # x main (dbl-buffer)
    if need_halo:
        fp += 2 * c_in_p * halo * cb                      # halo (dbl-buffer)
        fp += c_in_p * (tT + halo) * cb                   # window concat temp
    fp += n_w * ka * c_out_p * c_in_p * cb                # weights
    fp += n_w * c_out_p * 4                               # bias
    fp += 2 * c_out_p * tT * out_itemsize                 # output (dbl-buffer)
    fp += c_out_p * tT * 4                                # f32 accumulator
    return fp


# ---------------------------------------------------------------------------
# Fused NCW forward
# ---------------------------------------------------------------------------
def _forward_fused(x, w_f, bias_f, offsets, K, pad_left, T_out,
                   compute_dtype, out_dtype, time_tile, single_buffer_w):
    B, C_in, T = x.shape
    C_out = w_f.shape[0]
    Ka = len(offsets)
    out_itemsize = jnp.dtype(out_dtype).itemsize

    # Alignment pads (only matter for small / odd channel counts).
    C_in_p = _round_up(C_in, 16)
    C_out_p = _round_up(C_out, 16)

    need_halo = max(offsets) > 0
    halo = 128 * _cdiv(max(K - 1, 1), 128) if need_halo else 0
    gran = halo if need_halo else 128

    if time_tile is None:
        time_tile = _default_time_tile()
    budget = _vmem_budget_bytes()

    tT = max(gran, min(_round_up(time_tile, gran), _round_up(T_out, gran)))
    # v7x megacore: with B == 1 the only parallel axis is time -> need >= 2 tiles.
    while B == 1 and _cdiv(T_out, tT) < 2 and tT > gran:
        tT = max(gran, _round_up(tT // 2, gran))
    # Shrink the time tile until the pipeline footprint fits the VMEM budget.
    while (tT > gran and
           _fused_vmem_footprint(C_in_p, C_out_p, Ka, tT, halo, need_halo,
                                 out_itemsize, single_buffer_w) > budget):
        tT = max(gran, _round_up(tT // 2, gran))

    nT = _cdiv(T_out, tT)
    T_out_pad = nT * tT
    L = T_out_pad + halo

    # conv left-pad + zero tail (so every block read is in bounds) + channel pad.
    # TODO(synk): for HBM-bound small-channel layers, handle this padding inside
    # the kernel on boundary tiles instead of a wrapper-side HBM pass.
    tail = max(0, L - pad_left - T)
    x_k = jnp.pad(x.astype(compute_dtype),
                  ((0, 0), (0, C_in_p - C_in), (pad_left, tail)))
    if x_k.shape[2] > L:   # asymmetric context: trailing frames are never read
        x_k = x_k[:, :, :L]

    # Active-tap filters (Ka, C_out_p, C_in_p) and f32 bias column.
    w_taps = jnp.stack([w_f[:, :, d] for d in offsets], axis=0)
    w_taps = jnp.pad(w_taps, ((0, 0), (0, C_out_p - C_out), (0, C_in_p - C_in)))
    w_taps = w_taps.astype(compute_dtype)
    b_col = jnp.pad(bias_f, (0, C_out_p - C_out)).reshape(C_out_p, 1)

    fp = _fused_vmem_footprint(C_in_p, C_out_p, Ka, tT, halo, need_halo,
                               out_itemsize, single_buffer_w)
    vmem_limit = int(min(budget, max(2 * fp, 32 << 20)))
    cparams = pltpu.CompilerParams(
        dimension_semantics=("parallel", "parallel"),
        vmem_limit_bytes=vmem_limit)

    # Loop-invariant operands: optionally single-buffered to halve their VMEM.
    if single_buffer_w:
        w_spec = pl.BlockSpec((Ka, C_out_p, C_in_p), lambda b, t: (0, 0, 0),
                              pipeline_mode=pl.Buffered(1))
        b_spec = pl.BlockSpec((C_out_p, 1), lambda b, t: (0, 0),
                              pipeline_mode=pl.Buffered(1))
    else:
        w_spec = pl.BlockSpec((Ka, C_out_p, C_in_p), lambda b, t: (0, 0, 0))
        b_spec = pl.BlockSpec((C_out_p, 1), lambda b, t: (0, 0))

    x_spec = pl.BlockSpec((1, C_in_p, tT), lambda b, t: (b, 0, t))
    o_spec = pl.BlockSpec((1, C_out_p, tT), lambda b, t: (b, 0, t))
    out_shape = jax.ShapeDtypeStruct((B, C_out_p, T_out_pad), out_dtype)

    if need_halo:
        r = tT // halo   # exact: tT is a multiple of halo by construction
        h_spec = pl.BlockSpec((1, C_in_p, halo),
                              lambda b, t: (b, 0, (t + 1) * r))
        kernel = functools.partial(_tdnn_kernel_halo, offsets=offsets, tT=tT)
        out = pl.pallas_call(
            kernel, out_shape=out_shape, grid=(B, nT),
            in_specs=[x_spec, h_spec, w_spec, b_spec], out_specs=o_spec,
            compiler_params=cparams,
        )(x_k, x_k, w_taps, b_col)
    else:
        # context==[0]-style path: no halo DMA, no in-kernel copies at all.
        out = pl.pallas_call(
            _tdnn_kernel_nohalo, out_shape=out_shape, grid=(B, nT),
            in_specs=[x_spec, w_spec, b_spec], out_specs=o_spec,
            compiler_params=cparams,
        )(x_k, w_taps, b_col)

    return out[:, :C_out, :T_out]


# ---------------------------------------------------------------------------
# Public wrapper (mirrors TdnnAffine.forward)
# ---------------------------------------------------------------------------
def tdnn_affine(x, weight, bias, context, *, pad=True, stride=1, groups=1,
                norm_w=False, norm_f=False, compute_dtype=jnp.bfloat16,
                time_tile=None):
    """x: (B, C_in, T); weight: (C_out, C_in//groups, K); bias: (C_out,) or None.

    Returns (B, C_out, T_out) matching the module's F.conv1d semantics.
    Note: inputs/weights are quantized to `compute_dtype` (bf16 default) for
    the MXU with f32 accumulation; pass compute_dtype=jnp.float32 for closer
    parity with the f32 PyTorch conv1d.
    """
    assert x.ndim == 3
    B, C_in, T = x.shape
    C_out, C_in_g, K_w = weight.shape
    if groups != 1:
        # TODO(synk): grouped conv path not implemented in the kernel.
        raise NotImplementedError("tdnn_affine kernel supports groups=1 only")
    assert C_in_g == C_in
    for i in range(len(context) - 1):
        if context[i] >= context[i + 1]:
            raise ValueError(f"Context tuple {context} is invalid (ordering).")

    left = context[0] if context[0] < 0 else 0
    right = context[-1] if context[-1] > 0 else 0
    K = right - left + 1
    assert K_w == K
    out_dtype = x.dtype

    # Active taps == the module's 0/1 mask; filters are compacted to them.
    offsets = tuple(c - left for c in context)

    w_f = weight.astype(jnp.float32)
    if norm_w:
        # F.normalize(filters, dim=1) with eps clamp; the mask only zeroes
        # whole taps, so normalizing before/after compaction is identical.
        nrm = jnp.sqrt(jnp.sum(jnp.square(w_f), axis=1, keepdims=True))
        w_f = w_f / jnp.maximum(nrm, 1e-12)
    if norm_f:
        # Module only permits norm_f for tot_context == 1; the eps clamp keeps
        # padded zero frames at zero, so normalizing the raw input matches.
        nrm = jnp.sqrt(jnp.sum(jnp.square(x.astype(jnp.float32)),
                               axis=1, keepdims=True))
        x = (x.astype(jnp.float32) / jnp.maximum(nrm, 1e-12)).astype(out_dtype)

    pad_left = -left if pad else 0
    T_in = T + (-left) + right if pad else T
    if T_in < K:
        raise ValueError("input is shorter than the total context")
    T_out = T_in - K + 1                       # stride-1 output length

    bias_f = (bias if bias is not None
              else jnp.zeros((C_out,), jnp.float32)).astype(jnp.float32)

    # Single-buffer the resident weight only once it is big enough to matter.
    w_bytes = (len(offsets) * _round_up(C_out, 16) * _round_up(C_in, 16)
               * jnp.dtype(compute_dtype).itemsize)
    single_buffer_w = w_bytes > (4 << 20)

    try:
        out = _forward_fused(x, w_f, bias_f, offsets, K, pad_left, T_out,
                             compute_dtype, out_dtype, time_tile,
                             single_buffer_w)
        LAST_KERNEL_PATH[0] = ("fused+single_buffer_w" if single_buffer_w
                               else "fused")
    except Exception:
        # Retried only when the single-buffer hint was requested: the retry
        # runs the *identical* kernel with default (double) buffering, so
        # nothing is silently degraded; genuine errors re-raise here or on
        # the retry itself.
        if not single_buffer_w:
            raise
        out = _forward_fused(x, w_f, bias_f, offsets, K, pad_left, T_out,
                             compute_dtype, out_dtype, time_tile, False)
        LAST_KERNEL_PATH[0] = "fused"

    if stride > 1:
        # TODO(synk): stride>1 is computed densely then subsampled.
        out = out[:, :, ::stride]
    return out


# ---------------------------------------------------------------------------
# Pure-JAX reference (conv1d + context mask), same bf16 input quantization.
# ---------------------------------------------------------------------------
def _reference(x, weight, bias, context, pad=True, stride=1,
               compute_dtype=jnp.bfloat16):
    B, C_in, T = x.shape
    C_out, _, K = weight.shape
    left = context[0] if context[0] < 0 else 0
    right = context[-1] if context[-1] > 0 else 0
    xq = x.astype(compute_dtype).astype(jnp.float32)
    wq = weight.astype(compute_dtype).astype(jnp.float32)
    if pad:
        xq = jnp.pad(xq, ((0, 0), (0, 0), (-left, right)))
    T_out = xq.shape[2] - K + 1
    out = jnp.zeros((B, C_out, T_out), jnp.float32)
    for k in range(K):
        if (left + k) not in context:
            continue
        out = out + jnp.einsum('bct,oc->bot', xq[:, :, k:k + T_out],
                               wq[:, :, k],
                               precision=jax.lax.Precision.HIGHEST)
    if bias is not None:
        out = out + bias.astype(jnp.float32)[None, :, None]
    return out[:, :, ::stride].astype(x.dtype)


if __name__ == "__main__":
    key = jax.random.PRNGKey(0)
    k_x, k_w, k_b2, k_w2, k_x3, k_w3, k_b3 = jax.random.split(key, 7)

    # --- TdnnAffine(input_dim=16, output_dim=32, context=[-2, 0, 2]) -------
    input_dim, output_dim = 16, 32
    context = [-2, 0, 2]
    K = context[-1] - context[0] + 1                 # tot_context = 5
    B, T = 2, 16

    x = jax.random.normal(k_x, (B, input_dim, T), jnp.float32)
    weight = 0.01 * jax.random.normal(k_w, (output_dim, input_dim, K),
                                      jnp.float32)   # init_weight(): N(0, 0.01)
    bias = jnp.zeros((output_dim,), jnp.float32)     # init_weight(): zero bias

    y = jax.block_until_ready(tdnn_affine(x, weight, bias, context))
    y_ref = _reference(x, weight, bias, context)
    assert y.shape == (B, output_dim, T), y.shape
    assert jnp.allclose(y, y_ref, atol=2e-4, rtol=2e-4), \
        float(jnp.max(jnp.abs(y - y_ref)))

    # --- context=[0]: TdnnAffine as a plain linear layer (no-halo kernel) --
    w2 = 0.01 * jax.random.normal(k_w2, (output_dim, input_dim, 1), jnp.float32)
    b2 = 0.1 * jax.random.normal(k_b2, (output_dim,), jnp.float32)
    y2 = jax.block_until_ready(tdnn_affine(x, w2, b2, [0]))
    y2_ref = _reference(x, w2, b2, [0])
    assert y2.shape == (B, output_dim, T), y2.shape
    assert jnp.allclose(y2, y2_ref, atol=2e-4, rtol=2e-4), \
        float(jnp.max(jnp.abs(y2 - y2_ref)))

    # --- odd channel counts + pad=False (exercises alignment padding) ------
    in3, out3, ctx3, T3 = 12, 24, [-1, 0, 1], 19
    K3 = ctx3[-1] - ctx3[0] + 1
    x3 = jax.random.normal(k_x3, (B, in3, T3), jnp.float32)
    w3 = 0.01 * jax.random.normal(k_w3, (out3, in3, K3), jnp.float32)
    b3 = 0.1 * jax.random.normal(k_b3, (out3,), jnp.float32)
    y3 = jax.block_until_ready(tdnn_affine(x3, w3, b3, ctx3, pad=False))
    y3_ref = _reference(x3, w3, b3, ctx3, pad=False)
    assert y3.shape == (B, out3, T3 - K3 + 1), y3.shape
    assert jnp.allclose(y3, y3_ref, atol=2e-4, rtol=2e-4), \
        float(jnp.max(jnp.abs(y3 - y3_ref)))

    print("KERNEL_OK")
</pallas_src>

<mosaic_0001>
module attributes {stable_mosaic.version = 11 : i64} {
  func.func @_tdnn_kernel_halo(%arg0: i32, %arg1: i32, %arg2: memref<1x16x128xbf16, #tpu.memory_space<vmem>>, %arg3: memref<1x16x128xbf16, #tpu.memory_space<vmem>>, %arg4: memref<3x32x16xbf16, #tpu.memory_space<vmem>>, %arg5: memref<32x1xf32, #tpu.memory_space<vmem>>, %arg6: memref<1x32x128xf32, #tpu.memory_space<vmem>>) attributes {dimension_semantics = [#tpu.dimension_semantics<parallel>, #tpu.dimension_semantics<parallel>], iteration_bounds = array<i64: 2, 1>, scalar_prefetch = 0 : i64, scratch_operands = 0 : i64, tpu.core_type = #tpu.core_type<tc>, window_params = [{transform_indices = @transform_0, window_bounds = array<i64: 1, 16, 128>}, {transform_indices = @transform_1, window_bounds = array<i64: 1, 16, 128>}, {pipeline_mode = #tpu.pipeline_mode<synchronous>, transform_indices = @transform_2, window_bounds = array<i64: 3, 32, 16>}, {pipeline_mode = #tpu.pipeline_mode<synchronous>, transform_indices = @transform_3, window_bounds = array<i64: 32, 1>}, {transform_indices = @transform_4, window_bounds = array<i64: 1, 32, 128>}]} {
    %c0 = arith.constant 0 : index
    %c0_0 = arith.constant 0 : index
    %c0_1 = arith.constant 0 : index
    %0 = vector.load %arg2[%c0, %c0_0, %c0_1] : memref<1x16x128xbf16, #tpu.memory_space<vmem>>, vector<1x16x128xbf16>
    %1 = vector.shape_cast %0 : vector<1x16x128xbf16> to vector<16x128xbf16>
    %c0_2 = arith.constant 0 : index
    %c0_3 = arith.constant 0 : index
    %c0_4 = arith.constant 0 : index
    %2 = vector.load %arg3[%c0_2, %c0_3, %c0_4] : memref<1x16x128xbf16, #tpu.memory_space<vmem>>, vector<1x16x128xbf16>
    %3 = vector.shape_cast %2 : vector<1x16x128xbf16> to vector<16x128xbf16>
    %4 = tpu.concatenate %1, %3 in 1 : vector<16x128xbf16>, vector<16x128xbf16> -> vector<16x256xbf16>
    %c0_5 = arith.constant 0 : index
    %c0_6 = arith.constant 0 : index
    %c0_7 = arith.constant 0 : index
    %5 = vector.load %arg4[%c0_5, %c0_6, %c0_7] : memref<3x32x16xbf16, #tpu.memory_space<vmem>>, vector<1x32x16xbf16>
    %6 = vector.shape_cast %5 : vector<1x32x16xbf16> to vector<32x16xbf16>
    %cst = arith.constant dense<0.000000e+00> : vector<32x128xf32>
    %7 = tpu.matmul %6, %1, %cst {dimension_numbers = #tpu.dot_dimension_numbers<[1], [0], [0], [1], [0, 0, 1, 1], [], []>} : vector<32x16xbf16>, vector<16x128xbf16>, vector<32x128xf32> -> vector<32x128xf32>
    %8 = vector.extract_strided_slice %4 {offsets = [0, 2], sizes = [16, 128], strides = [1, 1]} : vector<16x256xbf16> to vector<16x128xbf16>
    %c1 = arith.constant 1 : index
    %c0_8 = arith.constant 0 : index
    %c0_9 = arith.constant 0 : index
    %9 = vector.load %arg4[%c1, %c0_8, %c0_9] : memref<3x32x16xbf16, #tpu.memory_space<vmem>>, vector<1x32x16xbf16>
    %10 = vector.shape_cast %9 : vector<1x32x16xbf16> to vector<32x16xbf16>
    %cst_10 = arith.constant dense<0.000000e+00> : vector<32x128xf32>
    %11 = tpu.matmul %10, %8, %cst_10 {dimension_numbers = #tpu.dot_dimension_numbers<[1], [0], [0], [1], [0, 0, 1, 1], [], []>} : vector<32x16xbf16>, vector<16x128xbf16>, vector<32x128xf32> -> vector<32x128xf32>
    %12 = arith.addf %7, %11 : vector<32x128xf32>
    %13 = vector.extract_strided_slice %4 {offsets = [0, 4], sizes = [16, 128], strides = [1, 1]} : vector<16x256xbf16> to vector<16x128xbf16>
    %c2 = arith.constant 2 : index
    %c0_11 = arith.constant 0 : index
    %c0_12 = arith.constant 0 : index
    %14 = vector.load %arg4[%c2, %c0_11, %c0_12] : memref<3x32x16xbf16, #tpu.memory_space<vmem>>, vector<1x32x16xbf16>
    %15 = vector.shape_cast %14 : vector<1x32x16xbf16> to vector<32x16xbf16>
    %cst_13 = arith.constant dense<0.000000e+00> : vector<32x128xf32>
    %16 = tpu.matmul %15, %13, %cst_13 {dimension_numbers = #tpu.dot_dimension_numbers<[1], [0], [0], [1], [0, 0, 1, 1], [], []>} : vector<32x16xbf16>, vector<16x128xbf16>, vector<32x128xf32> -> vector<32x128xf32>
    %17 = arith.addf %12, %16 : vector<32x128xf32>
    %c0_14 = arith.constant 0 : index
    %c0_15 = arith.constant 0 : index
    %18 = vector.load %arg5[%c0_14, %c0_15] : memref<32x1xf32, #tpu.memory_space<vmem>>, vector<32x1xf32>
    %19 = vector.broadcast %18 : vector<32x1xf32> to vector<32x128xf32>
    %20 = arith.addf %17, %19 : vector<32x128xf32>
    %c0_16 = arith.constant 0 : index
    %c0_17 = arith.constant 0 : index
    %c0_18 = arith.constant 0 : index
    %21 = vector.load %arg6[%c0_16, %c0_17, %c0_18] : memref<1x32x128xf32, #tpu.memory_space<vmem>>, vector<1x32x128xf32>
    %22 = vector.shape_cast %21 : vector<1x32x128xf32> to vector<32x128xf32>
    %23 = vector.shape_cast %20 : vector<32x128xf32> to vector<1x32x128xf32>
    tpu.vector_store %arg6[%c0_16, %c0_17, %c0_18], %23 {strides = array<i32>} : memref<1x32x128xf32, #tpu.memory_space<vmem>>, vector<1x32x128xf32>,
    return
  }
  func.func @transform_0(%arg0: i32, %arg1: i32) -> (i32, i32, i32) {
    %c0_i32 = arith.constant 0 : i32
    %c0_i32_0 = arith.constant 0 : i32
    return %arg0, %c0_i32, %arg1 : i32, i32, i32
  }
  func.func @transform_1(%arg0: i32, %arg1: i32) -> (i32, i32, i32) {
    %c1_i32 = arith.constant 1 : i32
    %0 = arith.addi %arg1, %c1_i32 : i32
    %c1_i32_0 = arith.constant 1 : i32
    %1 = arith.muli %0, %c1_i32_0 : i32
    %c0_i32 = arith.constant 0 : i32
    %c0_i32_1 = arith.constant 0 : i32
    return %arg0, %c0_i32, %1 : i32, i32, i32
  }
  func.func @transform_2(%arg0: i32, %arg1: i32) -> (i32, i32, i32) {
    %c0_i32 = arith.constant 0 : i32
    %c0_i32_0 = arith.constant 0 : i32
    %c0_i32_1 = arith.constant 0 : i32
    %c0_i32_2 = arith.constant 0 : i32
    return %c0_i32, %c0_i32_0, %c0_i32_1 : i32, i32, i32
  }
  func.func @transform_3(%arg0: i32, %arg1: i32) -> (i32, i32) {
    %c0_i32 = arith.constant 0 : i32
    %c0_i32_0 = arith.constant 0 : i32
    %c0_i32_1 = arith.constant 0 : i32
    return %c0_i32, %c0_i32_0 : i32, i32
  }
  func.func @transform_4(%arg0: i32, %arg1: i32) -> (i32, i32, i32) {
    %c0_i32 = arith.constant 0 : i32
    %c0_i32_0 = arith.constant 0 : i32
    return %arg0, %c0_i32, %arg1 : i32, i32, i32
  }
}

</mosaic_0001>

<llo_original>
// kernel: tpu_custom_call.1
$region0: #{tpu_custom_call.1}
  #allocation0 [shape = 'u32[]', space=smem, size = 0x4, offset = 0x4, fixed_abs, tag = 'smem constant byte address 0x4 - core index']
  #allocation1 [shape = 'u32[144,128]{1,0:T(1,128)}', space=vmem, size = 0x12000, scoped, tag = 'internal scratch']
  %s0 = inlined_call_operand.vmem [shape: bf16[2,16,256], index: 0, kind: input, shape index: {}]
  %s1 = inlined_call_operand.vmem [shape: bf16[2,16,256], index: 1, kind: input, shape index: {}]
  %s2 = inlined_call_operand.vmem [shape: bf16[3,32,16], index: 2, kind: input, shape index: {}]
  %s3 = inlined_call_operand.vmem [shape: f32[32,1], index: 3, kind: input, shape index: {}]
  %s4 = inlined_call_operand.hbm [shape: f32[2,32,128], index: 4, kind: output, shape index: {}]
  %s5 = sld [smem:[#allocation0]]
  $region131: #{tpu_custom_call.1} parent=0
    _
  %s7 = ssub.s32 1, %s5
  %s8 = scalar_select 0, %s7, %s5
  $region1: #{tpu_custom_call.1} parent=0
    #allocation2 [shape = 'u8[8192]{0}', space=vmem, size = 0x2000, scoped, tag = 'input window, operand 0']
    #allocation3 [shape = 'u8[8192]{0}', space=vmem, size = 0x2000, scoped, tag = 'input window, operand 1']
    #allocation4 [shape = 'u8[32768]{0}', space=vmem, size = 0x8000, scoped, tag = 'output window, operand 0']
    #allocation5 [shape = 's32[2]{0}', space=sflag, size = 0x8, scoped, tag = 'scoped memory for tpu_custom_call.1']
    %9 = vsyncpa [#allocation5], 0
    %s10 = scalar_lea.sflag [#allocation5], 1
    %11 = vsyncpa %s10, 0
    loop: start=0, step=1, limit=4
    $region2: #{tpu_custom_call.1} parent=1 // loop_pre_header
      _
    $region3: #{tpu_custom_call.1} parent=1 // loop_header
      %s13 = sphi 0, %s17
      %p14 = scmp.ge.s32.totalorder %s13, 4
      %s20 = sphi 0, %s32
      %s21 = sphi 0, %s28
      %s22 = sphi 0, %s20
      %s23 = sphi 0, %s21
      %s24 = sphi 0, %s22
      %s25 = sphi 0, %s23
      %s37 = sphi 0, %s39
      %s40 = sphi 0, %s37
      %s41 = sphi 0, %s40
      %s57 = sphi 0, %s41
      %s67 = sphi 0, %s69
      %s70 = sphi 0, %s67
      %s71 = sphi 0, %s70
      %s87 = sphi 0, %s71
      %s91 = sphi 0, %s91
      %s93 = sphi 0, %s91
      %s94 = sphi 0, %s93
      %s108 = sphi 0, %s94
      %s112 = sphi 0, %s112
      %s114 = sphi 0, %s112
      %s115 = sphi 0, %s114
      %s129 = sphi 0, %s115
      %s137 = sphi 0, %s139
      %s140 = sphi 0, %s137
      %s141 = sphi 0, %s140
      %s157 = sphi 0, %s141
    $region4: #{tpu_custom_call.1} parent=1 // loop_header_branch
      %16 = sbr.rel (%p14) target = $region8
    $region5: #{tpu_custom_call.1} parent=1 // loop_body
      %s18 = ssub.s32 %s13, 1
      %s19 = ssub.s32 %s13, 2
      %s26 = sadd.s32 1, %s21
      %p27 = scmp.ge.s32.totalorder %s26, 1
      %s28 = scalar_select %p27, 0, %s26
      %s29 = sadd.s32 1, %s20
      %s30 = scalar_select %p27, %s29, %s20
      %p31 = scmp.ge.s32.totalorder %s30, 2
      %s32 = scalar_select %p31, 0, %s30
      %s33 = ssub.s32 %s20, %s32
      %s34 = ssub.s32 %s21, %s28
      %s35 = sor.u32 %s33, %s34
      %p36 = scmp.eq.s32.totalorder %s35, 0
      %s38 = sadd.s32 %s37, 1
      %s39 = scalar_select %p36, %s37, %s38
      %p42 = pneg %p36
      %p43 = scmp.eq.s32.totalorder %s13, 1
      %p44 = por %p42, %p43
      %p45 = scmp.ne.s32.totalorder %s37, %s40
      %p46 = scmp.eq.s32.totalorder %s13, 0
      %p47 = por %p45, %p46
      %p48 = scmp.ne.s32.totalorder %s37, %s40
      %p49 = scmp.eq.s32.totalorder %s18, 1
      %p50 = por %p48, %p49
      %p51 = scmp.ne.s32.totalorder %s40, %s41
      %p52 = scmp.eq.s32.totalorder %s18, 0
      %p53 = por %p51, %p52
      %p54 = scmp.ne.s32.totalorder %s40, %s41
      %p55 = scmp.eq.s32.totalorder %s19, 1
      %p56 = por %p54, %p55
      %p58 = scmp.ne.s32.totalorder %s41, %s57
      %p59 = scmp.eq.s32.totalorder %s19, 0
      %p60 = por %p58, %p59
      %s61 = sadd.s32 %s21, 1
      %s62 = sadd.s32 %s28, 1
      %s63 = ssub.s32 %s20, %s32
      %s64 = ssub.s32 %s61, %s62
      %s65 = sor.u32 %s63, %s64
      %p66 = scmp.eq.s32.totalorder %s65, 0
      %s68 = sadd.s32 %s67, 1
      %s69 = scalar_select %p66, %s67, %s68
      %p72 = pneg %p66
      %p73 = scmp.eq.s32.totalorder %s13, 1
      %p74 = por %p72, %p73
      %p75 = scmp.ne.s32.totalorder %s67, %s70
      %p76 = scmp.eq.s32.totalorder %s13, 0
      %p77 = por %p75, %p76
      %p78 = scmp.ne.s32.totalorder %s67, %s70
      %p79 = scmp.eq.s32.totalorder %s18, 1
      %p80 = por %p78, %p79
      %p81 = scmp.ne.s32.totalorder %s70, %s71
      %p82 = scmp.eq.s32.totalorder %s18, 0
      %p83 = por %p81, %p82
      %p84 = scmp.ne.s32.totalorder %s70, %s71
      %p85 = scmp.eq.s32.totalorder %s19, 1
      %p86 = por %p84, %p85
      %p88 = scmp.ne.s32.totalorder %s71, %s87
      %p89 = scmp.eq.s32.totalorder %s19, 0
      %p90 = por %p88, %p89
      %s92 = sadd.s32 %s91, 1
      %p95 = scmp.eq.s32.totalorder %s13, 1
      %p96 = scmp.ne.s32.totalorder %s91, %s93
      %p97 = scmp.eq.s32.totalorder %s13, 0
      %p98 = por %p96, %p97
      %p99 = scmp.ne.s32.totalorder %s91, %s93
      %p100 = scmp.eq.s32.totalorder %s18, 1
      %p101 = por %p99, %p100
      %p102 = scmp.ne.s32.totalorder %s93, %s94
      %p103 = scmp.eq.s32.totalorder %s18, 0
      %p104 = por %p102, %p103
      %p105 = scmp.ne.s32.totalorder %s93, %s94
      %p106 = scmp.eq.s32.totalorder %s19, 1
      %p107 = por %p105, %p106
      %p109 = scmp.ne.s32.totalorder %s94, %s108
      %p110 = scmp.eq.s32.totalorder %s19, 0
      %p111 = por %p109, %p110
      %s113 = sadd.s32 %s112, 1
      %p116 = scmp.eq.s32.totalorder %s13, 1
      %p117 = scmp.ne.s32.totalorder %s112, %s114
      %p118 = scmp.eq.s32.totalorder %s13, 0
      %p119 = por %p117, %p118
      %p120 = scmp.ne.s32.totalorder %s112, %s114
      %p121 = scmp.eq.s32.totalorder %s18, 1
      %p122 = por %p120, %p121
      %p123 = scmp.ne.s32.totalorder %s114, %s115
      %p124 = scmp.eq.s32.totalorder %s18, 0
      %p125 = por %p123, %p124
      %p126 = scmp.ne.s32.totalorder %s114, %s115
      %p127 = scmp.eq.s32.totalorder %s19, 1
      %p128 = por %p126, %p127
      %p130 = scmp.ne.s32.totalorder %s115, %s129
      %p131 = scmp.eq.s32.totalorder %s19, 0
      %p132 = por %p130, %p131
      %s133 = ssub.s32 %s20, %s32
      %s134 = ssub.s32 %s21, %s28
      %s135 = sor.u32 %s133, %s134
      %p136 = scmp.eq.s32.totalorder %s135, 0
      %s138 = sadd.s32 %s137, 1
      %s139 = scalar_select %p136, %s137, %s138
      %p142 = pneg %p136
      %p143 = scmp.eq.s32.totalorder %s13, 1
      %p144 = por %p142, %p143
      %p145 = scmp.ne.s32.totalorder %s137, %s140
      %p146 = scmp.eq.s32.totalorder %s13, 0
      %p147 = por %p145, %p146
      %p148 = scmp.ne.s32.totalorder %s137, %s140
      %p149 = scmp.eq.s32.totalorder %s18, 1
      %p150 = por %p148, %p149
      %p151 = scmp.ne.s32.totalorder %s140, %s141
      %p152 = scmp.eq.s32.totalorder %s18, 0
      %p153 = por %p151, %p152
      %p154 = scmp.ne.s32.totalorder %s140, %s141
      %p155 = scmp.eq.s32.totalorder %s19, 1
      %p156 = por %p154, %p155
      %p158 = scmp.ne.s32.totalorder %s141, %s157
      %p159 = scmp.eq.s32.totalorder %s19, 0
      %p160 = por %p158, %p159
      %p161 = scmp.le.s32.totalorder 1, %s13
      %p162 = scmp.lt.s32.totalorder %s13, 3
      %p163 = pnand %p161, %p162
      %p164 = pneg %p163
      // Predicated region
      $region9: #{tpu_custom_call.1} parent=5 // pred_check
        _
      $region10: #{tpu_custom_call.1} parent=5 // pred_check_branch
        %166 = sbr.rel (%p163) target = $region12
      $region11: #{tpu_custom_call.1} parent=5 // pred_region
        %s167 = ssub.s32 %s13, 1
        // Predicated region
        $region13: #{tpu_custom_call.1} parent=11 // pred_check
          %p168 = pneg %p104
        $region14: #{tpu_custom_call.1} parent=11 // pred_check_branch
          %170 = sbr.rel (%p168) target = $region16
        $region15: #{tpu_custom_call.1} parent=11 // pred_region
          _
        $region16: #{tpu_custom_call.1} parent=11 // pred_fallthru
          _
        // Predicated region
        $region17: #{tpu_custom_call.1} parent=11 // pred_check
          %p171 = pneg %p125
        $region18: #{tpu_custom_call.1} parent=11 // pred_check_branch
          %173 = sbr.rel (%p171) target = $region20
        $region19: #{tpu_custom_call.1} parent=11 // pred_region
          _
        $region20: #{tpu_custom_call.1} parent=11 // pred_fallthru
          _
      $region12: #{tpu_custom_call.1} parent=5 // pred_fallthru
        _
      %p174 = scmp.lt.s32.totalorder %s13, 2
      // Predicated region
      $region21: #{tpu_custom_call.1} parent=5 // pred_check
        %p175 = pneg %p174
      $region22: #{tpu_custom_call.1} parent=5 // pred_check_branch
        %177 = sbr.rel (%p175) target = $region24
      $region23: #{tpu_custom_call.1} parent=5 // pred_region
        // Predicated region
        $region25: #{tpu_custom_call.1} parent=23 // pred_check
          %p178 = pneg %p47
        $region26: #{tpu_custom_call.1} parent=23 // pred_check_branch
          %180 = sbr.rel (%p178) target = $region28
        $region27: #{tpu_custom_call.1} parent=23 // pred_region
          %s181 = sand.u32 %s37, 1
          %s182 = sand.u32 %s37, 1
          %s183 = smul.addr %s182, 8
          %s184 = scalar_lea.vmem [#allocation2], %s183
          %s185 = smul.addr %s20, 4
          %s186 = sadd.s32 %s21, %s185
          %s187 = smul.addr %s186, 4
          %s188 = scalar_lea.vmem %s0, %s187
          // Predicated region
          $region29: #{tpu_custom_call.1} parent=27 // pred_check
            _
          $region30: #{tpu_custom_call.1} parent=27 // pred_check_branch
            %190 = sbr.rel (0) target = $region32
          $region31: #{tpu_custom_call.1} parent=27 // pred_region
            // Predicated region
            $region33: #{tpu_custom_call.1} parent=31 // pred_check
              _
            $region34: #{tpu_custom_call.1} parent=31 // pred_check_branch
              %192 = sbr.rel target = $region36
            $region35: #{tpu_custom_call.1} parent=31 // pred_region
              // Predicated region
              $region48: #{tpu_custom_call.1} parent=35 // pred_check
                _
              $region49: #{tpu_custom_call.1} parent=35 // pred_check_branch
                %209 = sbr.rel (0) target = $region51
              $region50: #{tpu_custom_call.1} parent=35 // pred_region
                loop: start=0, step=1, limit=1
                $region52: #{tpu_custom_call.1} parent=50 // loop_pre_header
                  _
                $region53: #{tpu_custom_call.1} parent=50 // loop_header
                  %s211 = sphi 0, %s215
                  %p212 = scmp.ge.s32.totalorder %s211, 1
                  %s216 = sphi %s188, %s188
                  %s217 = sphi %s184, %s184
                $region54: #{tpu_custom_call.1} parent=50 // loop_header_branch
                  %214 = sbr.rel (%p212) target = $region58
                $region55: #{tpu_custom_call.1} parent=50 // loop_body
                  _
                $region56: #{tpu_custom_call.1} parent=50 // loop_footer
                  %s215 = sadd.s32 1, %s211
                $region57: #{tpu_custom_call.1} parent=50 // loop_footer_branch
                  %210 = sbr.rel target = $region53
                $region58: #{tpu_custom_call.1} parent=50 // loop_exit
                  _
                loop: start=0, step=1, limit=1
                $region59: #{tpu_custom_call.1} parent=50 // loop_pre_header
                  _
                $region60: #{tpu_custom_call.1} parent=50 // loop_header
                  %s220 = sphi 0, %s224
                  %p221 = scmp.ge.s32.totalorder %s220, 1
                  %s225 = sphi %s188, %s188
                  %s226 = sphi %s184, %s184
                $region61: #{tpu_custom_call.1} parent=50 // loop_header_branch
                  %223 = sbr.rel (%p221) target = $region65
                $region62: #{tpu_custom_call.1} parent=50 // loop_body
                  %v227 = vld [vmem:[%s225] sm:$0xf]
                  %228 = vst [vmem:[%s226] sm:$0xf] %v227
                  %v229 = vld [vmem:[%s225 + $0x8] sm:$0xf]
                  %230 = vst [vmem:[%s226 + $0x4] sm:$0xf] %v229
                $region63: #{tpu_custom_call.1} parent=50 // loop_footer
                  %s224 = sadd.s32 1, %s220
                $region64: #{tpu_custom_call.1} parent=50 // loop_footer_branch
                  %219 = sbr.rel target = $region60
                $region65: #{tpu_custom_call.1} parent=50 // loop_exit
                  _
              $region51: #{tpu_custom_call.1} parent=35 // pred_fallthru
                _
            $region36: #{tpu_custom_call.1} parent=31 // pred_fallthru
              _
            // Predicated region
            $region37: #{tpu_custom_call.1} parent=31 // pred_check
              _
            $region38: #{tpu_custom_call.1} parent=31 // pred_check_branch
              %194 = sbr.rel (0) target = $region40
            $region39: #{tpu_custom_call.1} parent=31 // pred_region
              loop: start=0, step=1, limit=1
              $region41: #{tpu_custom_call.1} parent=39 // loop_pre_header
                _
              $region42: #{tpu_custom_call.1} parent=39 // loop_header
                %s197 = sphi 0, %s201
                %p198 = scmp.ge.s32.totalorder %s197, 1
                %s202 = sphi %s188, %s188
                %s203 = sphi %s184, %s184
              $region43: #{tpu_custom_call.1} parent=39 // loop_header_branch
                %200 = sbr.rel (%p198) target = $region47
              $region44: #{tpu_custom_call.1} parent=39 // loop_body
                %v204 = vld [vmem:[%s202] sm:$0xf]
                %205 = vst [vmem:[%s203] sm:$0xf] %v204
                %v206 = vld [vmem:[%s202 + $0x8] sm:$0xf]
                %207 = vst [vmem:[%s203 + $0x4] sm:$0xf] %v206
              $region45: #{tpu_custom_call.1} parent=39 // loop_footer
                %s201 = sadd.s32 1, %s197
              $region46: #{tpu_custom_call.1} parent=39 // loop_footer_branch
                %196 = sbr.rel target = $region42
              $region47: #{tpu_custom_call.1} parent=39 // loop_exit
                _
            $region40: #{tpu_custom_call.1} parent=31 // pred_fallthru
              _
          $region32: #{tpu_custom_call.1} parent=27 // pred_fallthru
            _
          %231 = vnop
        $region28: #{tpu_custom_call.1} parent=23 // pred_fallthru
          _
        // Predicated region
        $region66: #{tpu_custom_call.1} parent=23 // pred_check
          %p232 = pneg %p77
        $region67: #{tpu_custom_call.1} parent=23 // pred_check_branch
          %234 = sbr.rel (%p232) target = $region69
        $region68: #{tpu_custom_call.1} parent=23 // pred_region
          %s235 = sand.u32 %s67, 1
          %s236 = sand.u32 %s67, 1
          %s237 = smul.addr %s236, 8
          %s238 = scalar_lea.vmem [#allocation3], %s237
          %s239 = sadd.s32 %s21, 1
          %s240 = smul.addr %s20, 4
          %s241 = sadd.s32 %s239, %s240
          %s242 = smul.addr %s241, 4
          %s243 = scalar_lea.vmem %s1, %s242
          // Predicated region
          $region70: #{tpu_custom_call.1} parent=68 // pred_check
            _
          $region71: #{tpu_custom_call.1} parent=68 // pred_check_branch
            %245 = sbr.rel (0) target = $region73
          $region72: #{tpu_custom_call.1} parent=68 // pred_region
            // Predicated region
            $region74: #{tpu_custom_call.1} parent=72 // pred_check
              _
            $region75: #{tpu_custom_call.1} parent=72 // pred_check_branch
              %247 = sbr.rel target = $region77
            $region76: #{tpu_custom_call.1} parent=72 // pred_region
              // Predicated region
              $region89: #{tpu_custom_call.1} parent=76 // pred_check
                _
              $region90: #{tpu_custom_call.1} parent=76 // pred_check_branch
                %264 = sbr.rel (0) target = $region92
              $region91: #{tpu_custom_call.1} parent=76 // pred_region
                loop: start=0, step=1, limit=1
                $region93: #{tpu_custom_call.1} parent=91 // loop_pre_header
                  _
                $region94: #{tpu_custom_call.1} parent=91 // loop_header
                  %s266 = sphi 0, %s270
                  %p267 = scmp.ge.s32.totalorder %s266, 1
                  %s271 = sphi %s243, %s243
                  %s272 = sphi %s238, %s238
                $region95: #{tpu_custom_call.1} parent=91 // loop_header_branch
                  %269 = sbr.rel (%p267) target = $region99
                $region96: #{tpu_custom_call.1} parent=91 // loop_body
                  _
                $region97: #{tpu_custom_call.1} parent=91 // loop_footer
                  %s270 = sadd.s32 1, %s266
                $region98: #{tpu_custom_call.1} parent=91 // loop_footer_branch
                  %265 = sbr.rel target = $region94
                $region99: #{tpu_custom_call.1} parent=91 // loop_exit
                  _
                loop: start=0, step=1, limit=1
                $region100: #{tpu_custom_call.1} parent=91 // loop_pre_header
                  _
                $region101: #{tpu_custom_call.1} parent=91 // loop_header
                  %s275 = sphi 0, %s279
                  %p276 = scmp.ge.s32.totalorder %s275, 1
                  %s280 = sphi %s243, %s243
                  %s281 = sphi %s238, %s238
                $region102: #{tpu_custom_call.1} parent=91 // loop_header_branch
                  %278 = sbr.rel (%p276) target = $region106
                $region103: #{tpu_custom_call.1} parent=91 // loop_body
                  %v282 = vld [vmem:[%s280] sm:$0xf]
                  %283 = vst [vmem:[%s281] sm:$0xf] %v282
                  %v284 = vld [vmem:[%s280 + $0x8] sm:$0xf]
                  %285 = vst [vmem:[%s281 + $0x4] sm:$0xf] %v284
                $region104: #{tpu_custom_call.1} parent=91 // loop_footer
                  %s279 = sadd.s32 1, %s275
                $region105: #{tpu_custom_call.1} parent=91 // loop_footer_branch
                  %274 = sbr.rel target = $region101
                $region106: #{tpu_custom_call.1} parent=91 // loop_exit
                  _
              $region92: #{tpu_custom_call.1} parent=76 // pred_fallthru
                _
            $region77: #{tpu_custom_call.1} parent=72 // pred_fallthru
              _
            // Predicated region
            $region78: #{tpu_custom_call.1} parent=72 // pred_check
              _
            $region79: #{tpu_custom_call.1} parent=72 // pred_check_branch
              %249 = sbr.rel (0) target = $region81
            $region80: #{tpu_custom_call.1} parent=72 // pred_region
              loop: start=0, step=1, limit=1
              $region82: #{tpu_custom_call.1} parent=80 // loop_pre_header
                _
              $region83: #{tpu_custom_call.1} parent=80 // loop_header
                %s252 = sphi 0, %s256
                %p253 = scmp.ge.s32.totalorder %s252, 1
                %s257 = sphi %s243, %s243
                %s258 = sphi %s238, %s238
              $region84: #{tpu_custom_call.1} parent=80 // loop_header_branch
                %255 = sbr.rel (%p253) target = $region88
              $region85: #{tpu_custom_call.1} parent=80 // loop_body
                %v259 = vld [vmem:[%s257] sm:$0xf]
                %260 = vst [vmem:[%s258] sm:$0xf] %v259
                %v261 = vld [vmem:[%s257 + $0x8] sm:$0xf]
                %262 = vst [vmem:[%s258 + $0x4] sm:$0xf] %v261
              $region86: #{tpu_custom_call.1} parent=80 // loop_footer
                %s256 = sadd.s32 1, %s252
              $region87: #{tpu_custom_call.1} parent=80 // loop_footer_branch
                %251 = sbr.rel target = $region83
              $region88: #{tpu_custom_call.1} parent=80 // loop_exit
                _
            $region81: #{tpu_custom_call.1} parent=72 // pred_fallthru
              _
          $region73: #{tpu_custom_call.1} parent=68 // pred_fallthru
            _
          %286 = vnop
        $region69: #{tpu_custom_call.1} parent=23 // pred_fallthru
          _
      $region24: #{tpu_custom_call.1} parent=5 // pred_fallthru
        _
      %p287 = scmp.le.s32.totalorder 1, %s13
      %p288 = scmp.lt.s32.totalorder %s13, 3
      %p289 = pnand %p287, %p288
      %p290 = pneg %p289
      // Predicated region
      $region107: #{tpu_custom_call.1} parent=5 // pred_check
        _
      $region108: #{tpu_custom_call.1} parent=5 // pred_check_branch
        %292 = sbr.rel (%p289) target = $region110
      $region109: #{tpu_custom_call.1} parent=5 // pred_region
        %s293 = ssub.s32 %s13, 1
        %s294 = sand.u32 %s40, 1
        %s295 = sand.u32 %s40, 1
        %s296 = smul.addr %s295, 8
        %s297 = scalar_lea.vmem [#allocation2], %s296
        // Predicated region
        $region111: #{tpu_custom_call.1} parent=109 // pred_check
          %p298 = pneg %p53
        $region112: #{tpu_custom_call.1} parent=109 // pred_check_branch
          %300 = sbr.rel (%p298) target = $region114
        $region113: #{tpu_custom_call.1} parent=109 // pred_region
          _
        $region114: #{tpu_custom_call.1} parent=109 // pred_fallthru
          _
        %s301 = sand.u32 %s70, 1
        %s302 = sand.u32 %s70, 1
        %s303 = smul.addr %s302, 8
        %s304 = scalar_lea.vmem [#allocation3], %s303
        // Predicated region
        $region115: #{tpu_custom_call.1} parent=109 // pred_check
          %p305 = pneg %p83
        $region116: #{tpu_custom_call.1} parent=109 // pred_check_branch
          %307 = sbr.rel (%p305) target = $region118
        $region117: #{tpu_custom_call.1} parent=109 // pred_region
          _
        $region118: #{tpu_custom_call.1} parent=109 // pred_fallthru
          _
        %s308 = sand.u32 %s40, 1
        %s309 = sand.u32 %s40, 1
        %s310 = smul.addr %s309, 8
        %s311 = scalar_lea.vmem [#allocation2], %s310
        %p312 = pneg %p53
        %p313 = pneg %p50
        %s314 = sand.u32 %s70, 1
        %s315 = sand.u32 %s70, 1
        %s316 = smul.addr %s315, 8
        %s317 = scalar_lea.vmem [#allocation3], %s316
        %p318 = pneg %p83
        %p319 = pneg %p80
        %p320 = pneg %p104
        %p321 = pneg %p101
        %p322 = pneg %p125
        %p323 = pneg %p122
        %p324 = pneg %p153
        %p325 = pneg %p150
        %s326 = sand.u32 %s140, 1
        %s327 = scalar_lea.sflag [#allocation5], %s326
        %s328 = sand.u32 %s140, 1
        %s329 = smul.addr %s328, 32
        %s330 = scalar_lea.vmem [#allocation4], %s329
        %s331 = sadd.s32 %s23, 1
        %v333 = vld [vmem:[%s297] sm:$0xf]
        %v334 = vld [vmem:[%s297 + $0x4] sm:$0xf]
        %v335 = vld [vmem:[%s304] sm:$0xf]
        %v336 = vld [vmem:[%s304 + $0x4] sm:$0xf]
        %v339 = vunpack.c.l.b16 %v333
        %v340 = vunpack.c.l.b16 %v334
        %v341 = vpack.c.b16 %v340, %v339
        %v344 = vunpack.c.l.b16 %v335
        %v345 = vunpack.c.l.b16 %v336
        %v346 = vpack.c.b16 %v345, %v344
        %v347 = vld [vmem:[%s2] sm:$0xf]
        %v348 = vld [vmem:[%s2 + $0x4] sm:$0xf]
        %v349 = vld [vmem:[%s2 + $0x8] sm:$0xf]
        %v350 = vld [vmem:[%s2 + $0xc] sm:$0xf]
        %s351 = scalar_lea.vmem %s2, 16
        %v352 = vld [vmem:[%s351] sm:$0xf]
        %v353 = vld [vmem:[%s351 + $0x4] sm:$0xf]
        %v354 = vld [vmem:[%s351 + $0x8] sm:$0xf]
        %v355 = vld [vmem:[%s351 + $0xc] sm:$0xf]
        %v360 = vunpack.c.l.b16 %v352
        %v361 = vunpack.c.l.b16 %v353
        %v362 = vunpack.c.l.b16 %v354
        %v363 = vunpack.c.l.b16 %v355
        %v364 = vpack.c.b16 %v361, %v360
        %v365 = vpack.c.b16 %v363, %v362
        %366 = vrot.lane.b32.xlu0 %v341, 126
        %v367 = vpop.permute.xlu0 %366
        %368 = vrot.lane.b32.xlu0 %v346, 126
        %v369 = vpop.permute.xlu0 %368
        %vm370 = vcmask 1031168
        %v371 = vsel %vm370, %v367, %v369
        %vm373 = vcmask 130048
        %v375 = vsel %vm373, %v364, 0
        %v378 = vsel %vm373, %v365, 0
        %380 = vmatprep.subr.bf16.mxu0 0
        %381 = vmatpush1.bf16.msra.mxu0 %v371
        %382 = vmatprep.subr.bf16.mxu0 0
        %383 = vmatpush1.bf16.msra.mxu0 0
        %384 = vmatprep.subr.bf16.mxu0 0
        %385 = vmatpush1.bf16.msra.mxu0 0
        %386 = vmatprep.subr.bf16.mxu0 0
        %387 = vmatpush1.bf16.msra.mxu0 0
        %388 = vmatprep.subr.bf16.mxu0 0
        %389 = vmatpush1.bf16.msra.mxu0 0
        %390 = vmatprep.subr.bf16.mxu0 0
        %391 = vmatpush1.bf16.msra.mxu0 0
        %392 = vmatprep.subr.bf16.mxu0 0
        %393 = vmatpush1.bf16.msra.mxu0 0
        %394 = vmatprep.subr.bf16.mxu0 0
        %395 = vmatpush1.bf16.msra.mxu0 0
        %396 = vmatprep.subr.bf16.mxu0 0
        %397 = vmatpush1.bf16.msra.mxu0 0
        %398 = vmatprep.subr.bf16.mxu0 0
        %399 = vmatpush1.bf16.msra.mxu0 0
        %400 = vmatprep.subr.bf16.mxu0 0
        %401 = vmatpush1.bf16.msra.mxu0 0
        %402 = vmatprep.subr.bf16.mxu0 0
        %403 = vmatpush1.bf16.msra.mxu0 0
        %404 = vmatprep.subr.bf16.mxu0 0
        %405 = vmatpush1.bf16.msra.mxu0 0
        %406 = vmatprep.subr.bf16.mxu0 0
        %407 = vmatpush1.bf16.msra.mxu0 0
        %408 = vmatprep.subr.bf16.mxu0 0
        %409 = vmatpush1.bf16.msra.mxu0 0
        %410 = vmatprep.subr.bf16.mxu0 0
        %411 = vmatpush1.bf16.msra.mxu0 0
        %412 = vmatprep.mubr.bf16.mxu0 0
        %413 = vmatmul.mubr.bf16.gmra.mrb[0].mxu0 %v375
        %v414 = vpop.f32.mrb[0].mxu0
        %v415 = vadd.f32 0.0, %v414
        %v416 = vpop.f32.mrb[0].mxu0
        %v417 = vpop.f32.mrb[0].mxu0
        %v418 = vadd.f32 0.0, %v417
        %v419 = vpop.f32.mrb[0].mxu0
        %420 = vmatprep.mubr.bf16.mxu0 0
        %421 = vmatmul.mubr.bf16.gmra.mrb[0].mxu0 %v378
        %v422 = vpop.f32.mrb[0].mxu0
        %v423 = vadd.f32 0.0, %v422
        %v424 = vpop.f32.mrb[0].mxu0
        %v425 = vpop.f32.mrb[0].mxu0
        %v426 = vadd.f32 0.0, %v425
        %v427 = vpop.f32.mrb[0].mxu0
        %428 = vdwg.mxu0
        %v433 = vunpack.c.l.b16 %v347
        %v434 = vunpack.c.l.b16 %v348
        %v435 = vunpack.c.l.b16 %v349
        %v436 = vunpack.c.l.b16 %v350
        %v437 = vpack.c.b16 %v434, %v433
        %v438 = vpack.c.b16 %v436, %v435
        %v441 = vsel %vm373, %v437, 0
        %v444 = vsel %vm373, %v438, 0
        %446 = vmatprep.subr.bf16.mxu0 0
        %447 = vmatpush1.bf16.msra.mxu0 %v341
        %448 = vmatprep.subr.bf16.mxu0 0
        %449 = vmatpush1.bf16.msra.mxu0 0
        %450 = vmatprep.subr.bf16.mxu0 0
        %451 = vmatpush1.bf16.msra.mxu0 0
        %452 = vmatprep.subr.bf16.mxu0 0
        %453 = vmatpush1.bf16.msra.mxu0 0
        %454 = vmatprep.subr.bf16.mxu0 0
        %455 = vmatpush1.bf16.msra.mxu0 0
        %456 = vmatprep.subr.bf16.mxu0 0
        %457 = vmatpush1.bf16.msra.mxu0 0
        %458 = vmatprep.subr.bf16.mxu0 0
        %459 = vmatpush1.bf16.msra.mxu0 0
        %460 = vmatprep.subr.bf16.mxu0 0
        %461 = vmatpush1.bf16.msra.mxu0 0
        %462 = vmatprep.subr.bf16.mxu0 0
        %463 = vmatpush1.bf16.msra.mxu0 0
        %464 = vmatprep.subr.bf16.mxu0 0
        %465 = vmatpush1.bf16.msra.mxu0 0
        %466 = vmatprep.subr.bf16.mxu0 0
        %467 = vmatpush1.bf16.msra.mxu0 0
        %468 = vmatprep.subr.bf16.mxu0 0
        %469 = vmatpush1.bf16.msra.mxu0 0
        %470 = vmatprep.subr.bf16.mxu0 0
        %471 = vmatpush1.bf16.msra.mxu0 0
        %472 = vmatprep.subr.bf16.mxu0 0
        %473 = vmatpush1.bf16.msra.mxu0 0
        %474 = vmatprep.subr.bf16.mxu0 0
        %475 = vmatpush1.bf16.msra.mxu0 0
        %476 = vmatprep.subr.bf16.mxu0 0
        %477 = vmatpush1.bf16.msra.mxu0 0
        %478 = vmatprep.mubr.bf16.mxu0 0
        %479 = vmatmul.mubr.bf16.gmra.mrb[0].mxu0 %v441
        %v480 = vpop.f32.mrb[0].mxu0
        %v481 = vadd.f32 %v415, %v480
        %v482 = vpop.f32.mrb[0].mxu0
        %v483 = vpop.f32.mrb[0].mxu0
        %v484 = vadd.f32 %v418, %v483
        %v485 = vpop.f32.mrb[0].mxu0
        %486 = vmatprep.mubr.bf16.mxu0 0
        %487 = vmatmul.mubr.bf16.gmra.mrb[0].mxu0 %v444
        %v488 = vpop.f32.mrb[0].mxu0
        %v489 = vadd.f32 %v423, %v488
        %v490 = vpop.f32.mrb[0].mxu0
        %v491 = vpop.f32.mrb[0].mxu0
        %v492 = vadd.f32 %v426, %v491
        %v493 = vpop.f32.mrb[0].mxu0
        %494 = vdwg.mxu0
        %s495 = scalar_lea.vmem %s2, 32
        %v496 = vld [vmem:[%s495] sm:$0xf]
        %v497 = vld [vmem:[%s495 + $0x4] sm:$0xf]
        %v498 = vld [vmem:[%s495 + $0x8] sm:$0xf]
        %v499 = vld [vmem:[%s495 + $0xc] sm:$0xf]
        %v504 = vunpack.c.l.b16 %v496
        %v505 = vunpack.c.l.b16 %v497
        %v506 = vunpack.c.l.b16 %v498
        %v507 = vunpack.c.l.b16 %v499
        %v508 = vpack.c.b16 %v505, %v504
        %v509 = vpack.c.b16 %v507, %v506
        %510 = vrot.lane.b32.xlu0 %v341, 124
        %v511 = vpop.permute.xlu0 %510
        %512 = vrot.lane.b32.xlu0 %v346, 124
        %v513 = vpop.permute.xlu0 %512
        %vm514 = vcmask 1014784
        %v515 = vsel %vm514, %v511, %v513
        %v518 = vsel %vm373, %v508, 0
        %v521 = vsel %vm373, %v509, 0
        %523 = vmatprep.subr.bf16.mxu0 0
        %524 = vmatpush1.bf16.msra.mxu0 %v515
        %525 = vmatprep.subr.bf16.mxu0 0
        %526 = vmatpush1.bf16.msra.mxu0 0
        %527 = vmatprep.subr.bf16.mxu0 0
        %528 = vmatpush1.bf16.msra.mxu0 0
        %529 = vmatprep.subr.bf16.mxu0 0
        %530 = vmatpush1.bf16.msra.mxu0 0
        %531 = vmatprep.subr.bf16.mxu0 0
        %532 = vmatpush1.bf16.msra.mxu0 0
        %533 = vmatprep.subr.bf16.mxu0 0
        %534 = vmatpush1.bf16.msra.mxu0 0
        %535 = vmatprep.subr.bf16.mxu0 0
        %536 = vmatpush1.bf16.msra.mxu0 0
        %537 = vmatprep.subr.bf16.mxu0 0
        %538 = vmatpush1.bf16.msra.mxu0 0
        %539 = vmatprep.subr.bf16.mxu0 0
        %540 = vmatpush1.bf16.msra.mxu0 0
        %541 = vmatprep.subr.bf16.mxu0 0
        %542 = vmatpush1.bf16.msra.mxu0 0
        %543 = vmatprep.subr.bf16.mxu0 0
        %544 = vmatpush1.bf16.msra.mxu0 0
        %545 = vmatprep.subr.bf16.mxu0 0
        %546 = vmatpush1.bf16.msra.mxu0 0
        %547 = vmatprep.subr.bf16.mxu0 0
        %548 = vmatpush1.bf16.msra.mxu0 0
        %549 = vmatprep.subr.bf16.mxu0 0
        %550 = vmatpush1.bf16.msra.mxu0 0
        %551 = vmatprep.subr.bf16.mxu0 0
        %552 = vmatpush1.bf16.msra.mxu0 0
        %553 = vmatprep.subr.bf16.mxu0 0
        %554 = vmatpush1.bf16.msra.mxu0 0
        %555 = vmatprep.mubr.bf16.mxu0 0
        %556 = vmatmul.mubr.bf16.gmra.mrb[0].mxu0 %v518
        %v557 = vpop.f32.mrb[0].mxu0
        %v558 = vadd.f32 0.0, %v557
        %v559 = vpop.f32.mrb[0].mxu0
        %v560 = vpop.f32.mrb[0].mxu0
        %v561 = vadd.f32 0.0, %v560
        %v562 = vpop.f32.mrb[0].mxu0
        %563 = vmatprep.mubr.bf16.mxu0 0
        %564 = vmatmul.mubr.bf16.gmra.mrb[0].mxu0 %v521
        %v565 = vpop.f32.mrb[0].mxu0
        %v566 = vadd.f32 0.0, %v565
        %v567 = vpop.f32.mrb[0].mxu0
        %v568 = vpop.f32.mrb[0].mxu0
        %v569 = vadd.f32 0.0, %v568
        %v570 = vpop.f32.mrb[0].mxu0
        %571 = vdwg.mxu0
        %v572 = vadd.f32 %v481, %v558
        %v573 = vadd.f32 %v484, %v561
        %v574 = vadd.f32 %v489, %v566
        %v575 = vadd.f32 %v492, %v569
        %v576 = vld [vmem:[%s3] sm:$0xff]
        %v577 = vld [vmem:[%s3 + $0x8] sm:$0xff]
        %v578 = vld [vmem:[%s3 + $0x10] sm:$0xff]
        %v579 = vld [vmem:[%s3 + $0x18] sm:$0xff]
        %581 = vset.pattern.permute.xlu0 0
        %582 = vperm.xlu0 %581, %v576
        %v583 = vpop.permute.xlu0 %582
        %586 = vset.pattern.permute.xlu0 0
        %587 = vperm.xlu0 %586, %v577
        %v588 = vpop.permute.xlu0 %587
        %591 = vset.pattern.permute.xlu0 0
        %592 = vperm.xlu0 %591, %v578
        %v593 = vpop.permute.xlu0 %592
        %596 = vset.pattern.permute.xlu0 0
        %597 = vperm.xlu0 %596, %v579
        %v598 = vpop.permute.xlu0 %597
        %v600 = vadd.f32 %v572, %v583
        %v601 = vadd.f32 %v573, %v588
        %v602 = vadd.f32 %v574, %v593
        %v603 = vadd.f32 %v575, %v598
        %604 = vst [vmem:[%s330] sm:$0xff] %v600
        %605 = vst [vmem:[%s330 + $0x8] sm:$0xff] %v601
        %606 = vst [vmem:[%s330 + $0x10] sm:$0xff] %v602
        %607 = vst [vmem:[%s330 + $0x18] sm:$0xff] %v603
        %s608 = sand.u32 %s140, 1
        %s609 = scalar_lea.sflag [#allocation5], %s608
        %s610 = sand.u32 %s140, 1
        %s611 = smul.addr %s610, 32
        %s612 = scalar_lea.vmem [#allocation4], %s611
        // Predicated region
        $region119: #{tpu_custom_call.1} parent=109 // pred_check
          %p613 = pneg %p150
        $region120: #{tpu_custom_call.1} parent=109 // pred_check_branch
          %615 = sbr.rel (%p613) target = $region122
        $region121: #{tpu_custom_call.1} parent=109 // pred_region
          %s617 = ssub.s32 512, 512
          %618 = vsyncadd %s609, %s617
          %s619 = smul.addr %s22, 4
          %s620 = sadd.s32 %s23, %s619
          %s621 = smul.addr %s620, 128
          %s622 = scalar_lea.hbm %s4, %s621
          %s623 = sshll.u32 %s612, 4
          %s624 = int_to_ptr.vmem [resolvable:$true] %s623
          %629 = dma.vmem_to_hbm [thread:$0]  %s624, 512, %s622, %s609, 128, 128, 8
        $region122: #{tpu_custom_call.1} parent=109 // pred_fallthru
          _
      $region110: #{tpu_custom_call.1} parent=5 // pred_fallthru
        _
      %p630 = scmp.le.s32.totalorder 2, %s13
      // Predicated region
      $region123: #{tpu_custom_call.1} parent=5 // pred_check
        %p631 = pneg %p630
      $region124: #{tpu_custom_call.1} parent=5 // pred_check_branch
        %633 = sbr.rel (%p631) target = $region126
      $region125: #{tpu_custom_call.1} parent=5 // pred_region
        %s634 = ssub.s32 %s13, 2
        // Predicated region
        $region127: #{tpu_custom_call.1} parent=125 // pred_check
          %p635 = pneg %p156
        $region128: #{tpu_custom_call.1} parent=125 // pred_check_branch
          %637 = sbr.rel (%p635) target = $region130
        $region129: #{tpu_custom_call.1} parent=125 // pred_region
          %s638 = sand.u32 %s141, 1
          %s639 = scalar_lea.sflag [#allocation5], %s638
          %s640 = sand.u32 %s141, 1
          %s641 = smul.addr %s640, 32
          %s642 = scalar_lea.vmem [#allocation4], %s641
          %643 = dma.done %s639, 512
        $region130: #{tpu_custom_call.1} parent=125 // pred_fallthru
          _
      $region126: #{tpu_custom_call.1} parent=5 // pred_fallthru
        _
    $region6: #{tpu_custom_call.1} parent=1 // loop_footer
      %s17 = sadd.s32 1, %s13
    $region7: #{tpu_custom_call.1} parent=1 // loop_footer_branch
      %12 = sbr.rel target = $region3
    $region8: #{tpu_custom_call.1} parent=1 // loop_exit
      _
    %644 = vsyncpa [#allocation5], 1
    %s645 = scalar_lea.sflag [#allocation5], 1
    %646 = vsyncpa %s645, 1

</llo_original>
